<compile_context>
chip_gen: v6e
topology: v6e:2x2x1
jax: 0.10.0
libtpu: 0.0.40
codegen_flags: <defaults>
</compile_context>

<pallas_src>
import numpy as np
import jax
import jax.numpy as jnp
from jax.experimental import pallas as pl
from jax.experimental.pallas import tpu as pltpu


# --------------------------- constant operators ------------------------------

def _linear_upsample_matrix(s):
    """1-D linear interpolation matrix, size s -> 2s, align_corners=True."""
    out = 2 * s
    U = np.zeros((out, s), dtype=np.float32)
    if s == 1:
        U[:, 0] = 1.0
        return U
    for i in range(out):
        src = i * (s - 1) / (out - 1)
        f = int(np.floor(src))
        frac = src - f
        if f >= s - 1:
            U[i, s - 1] = 1.0
        else:
            U[i, f] = 1.0 - frac
            U[i, f + 1] = frac
    return U


def _fold_bn(w, b, gamma, beta, mean, var, eps=1e-5):
    """Fold eval-mode BatchNorm into a (Cin, Cout) matmul weight + bias."""
    scale = gamma / jnp.sqrt(var + eps)
    return w * scale[None, :], (b - mean) * scale + beta


# ----------------------------- Pallas kernels --------------------------------

def _make_mask_kernel(C, Dh, HhWh, offs):
    off_wx, off_bx, off_wg, off_bg, off_wr, off_br = offs

    def kernel(p_ref, xp_ref, g_ref, m_ref):
        # Conv_x+BN_x (half resolution, commuted with AvgPool), Conv_g+BN_g, add,
        # ReLU, Conv_relu+BN_relu, sigmoid — all VPU scalar-broadcast FMAs.
        # xp/g planes are read inside the loops (not hoisted up front) so live
        # vreg data stays bounded at realistic Dh*HhWh.
        r = jnp.zeros((Dh, HhWh), jnp.float32) + p_ref[off_br]
        for co in range(C):
            a = (jnp.zeros((Dh, HhWh), jnp.float32)
                 + (p_ref[off_bx + co] + p_ref[off_bg + co]))
            for ci in range(C):
                a = a + p_ref[off_wx + ci * C + co] * xp_ref[0, ci]
            for ci in range(2 * C):
                a = a + p_ref[off_wg + ci * C + co] * g_ref[0, ci]
            a = jnp.maximum(a, 0.0)                    # ReLU
            r = r + p_ref[off_wr + co] * a             # Conv_relu (C -> 1)
        # exp routes to the EUP; exact divide keeps the strict f32 tolerance.
        # (pl.reciprocal(..., approx=True) would push the divide to the EUP too.)
        m_ref[0] = 1.0 / (1.0 + jnp.exp(-r))

    return kernel


def _gate_kernel(x_ref, m_ref, ud_ref, o_ref):
    # Depth-axis trilinear upsample of this tile's mask rows: (TD, Dh) @ (Dh, HW).
    mask = jnp.dot(ud_ref[...], m_ref[0], preferred_element_type=jnp.float32)
    # Single broadcast multiply; output block is lane-dense in its last dim (HW).
    o_ref[...] = (x_ref[...] * mask[None, None]).astype(o_ref.dtype)


# ------------------------------- wrapper -------------------------------------

def atten_gate_block(x_in, g_in, params):
    """x_in: (N, C, D, H, W); g_in: (N, 2C, D/2, H/2, W/2)  (PyTorch NCDHW)."""
    N, C, D, H, W = x_in.shape
    Dh, Hh, Wh = D // 2, H // 2, W // 2
    HW, HhWh = H * W, Hh * Wh
    S, Sh = D * HW, Dh * HhWh

    x_in = x_in.astype(jnp.float32)
    g_in = g_in.astype(jnp.float32)

    # AvgPool3d(2,2) commuted with the affine Conv_x/BN_x: pool x first (cheap XLA
    # reshape-mean), run the folded conv at half resolution in the mask kernel.
    x_pool = x_in.reshape(N, C, Dh, 2, Hh, 2, Wh, 2).mean(axis=(3, 5, 7))
    x_pool = x_pool.reshape(N, C, Dh, HhWh)

    g = g_in.reshape(N, 2 * C, Dh, HhWh)        # channels-first, free reshapes only
    x = x_in.reshape(N, C, D, HW)

    # fold eval-mode BN into the 1x1x1 convs; pack all scalars into one SMEM array
    wx, bx = _fold_bn(params["wx"], params["bx"], *params["bn_x"])
    wg, bg = _fold_bn(params["wg"], params["bg"], *params["bn_g"])
    wr, br = _fold_bn(params["wr"], params["br"], *params["bn_r"])
    packed = jnp.concatenate([wx.reshape(-1), bx.reshape(-1),
                              wg.reshape(-1), bg.reshape(-1),
                              wr.reshape(-1), br.reshape(-1)]).astype(jnp.float32)
    off_wx = 0
    off_bx = off_wx + C * C
    off_wg = off_bx + C
    off_bg = off_wg + 2 * C * C
    off_wr = off_bg + C
    off_br = off_wr + C
    offs = (off_wx, off_bx, off_wg, off_bg, off_wr, off_br)

    # ---------------- call 1: half-resolution attention mask --------------------
    need_mask = 4 * 2 * (3 * C + 1) * Sh                 # double-buffered blocks
    vmem_mask = int(min(max(2 * need_mask + (4 << 20), 32 << 20), 64 << 20))
    vmem_mask = max(vmem_mask, need_mask + (2 << 20))
    mask_cost = pl.CostEstimate(
        flops=int(2 * N * Sh * C * (3 * C + 2)),
        transcendentals=int(N * Sh),
        bytes_accessed=int(4 * (N * (3 * C + 1) * Sh + packed.size)),
    )
    m_half = pl.pallas_call(
        _make_mask_kernel(C, Dh, HhWh, offs),
        out_shape=jax.ShapeDtypeStruct((N, Dh, HhWh), jnp.float32),
        grid_spec=pltpu.PrefetchScalarGridSpec(
            num_scalar_prefetch=1,
            grid=(N,),
            in_specs=[
                pl.BlockSpec((1, C, Dh, HhWh), lambda n, p: (n, 0, 0, 0)),      # x_pool
                pl.BlockSpec((1, 2 * C, Dh, HhWh), lambda n, p: (n, 0, 0, 0)),  # g
            ],
            out_specs=pl.BlockSpec((1, Dh, HhWh), lambda n, p: (n, 0, 0)),
        ),
        compiler_params=pltpu.CompilerParams(
            dimension_semantics=("parallel",),
            vmem_limit_bytes=vmem_mask),
        cost_estimate=mask_cost,
    )(packed, x_pool, g)

    # ---------------- separable H/W trilinear upsample (XLA glue) ---------------
    UH = jnp.asarray(_linear_upsample_matrix(Hh))          # (H, Hh)
    UW = jnp.asarray(_linear_upsample_matrix(Wh))          # (W, Wh)
    m_hw = jnp.einsum("ndhw,Hh,Ww->ndHW",
                      m_half.reshape(N, Dh, Hh, Wh), UH, UW).reshape(N, Dh, HW)

    ud = jnp.asarray(_linear_upsample_matrix(Dh))          # (D, Dh)

    # ---------------- call 2: full-resolution gating sweep ----------------------
    # Generation-aware depth-tile size: largest TD whose double-buffered x/out
    # tiles (+ resident half-depth mask, + UD rows) fit a VMEM budget.
    try:
        vmem_cap = int(pltpu.get_tpu_info().vmem_capacity_bytes)
    except Exception:
        vmem_cap = 64 << 20                              # conservative (v7x-sized)
    budget = max(vmem_cap // 3, 16 << 20)

    def tile_bytes(td):
        return 4 * (4 * C * td * HW + 2 * Dh * HW + 2 * td * Dh)

    cands = [td for td in range(D, 0, -1)
             if D % td == 0 and (td % 8 == 0 or td == D)]
    TD = next((td for td in cands if tile_bytes(td) <= budget), cands[-1])
    T = D // TD

    need_gate = tile_bytes(TD)
    vmem_gate = int(min(max(2 * need_gate + (4 << 20), 32 << 20), 64 << 20))
    vmem_gate = max(vmem_gate, need_gate + (2 << 20))
    gate_cost = pl.CostEstimate(
        flops=int(2 * N * D * HW * Dh + N * C * S),
        transcendentals=0,
        bytes_accessed=int(4 * (2 * N * C * S + N * Dh * HW + D * Dh)),
    )

    out = pl.pallas_call(
        _gate_kernel,
        out_shape=jax.ShapeDtypeStruct((N, C, D, HW), jnp.float32),
        grid_spec=pltpu.PrefetchScalarGridSpec(
            num_scalar_prefetch=0,
            grid=(N, T),
            in_specs=[
                pl.BlockSpec((1, C, TD, HW), lambda n, t: (n, 0, t, 0)),   # x tile
                # half-depth mask: invariant across t, so Pallas re-fetches it only
                # when n changes.  (pipeline_mode=pl.Buffered(1) would single-buffer
                # it on VMEM-tight parts; left at default for portability.)
                pl.BlockSpec((1, Dh, HW), lambda n, t: (n, 0, 0)),          # mask
                pl.BlockSpec((TD, Dh), lambda n, t: (t, 0)),                # UD rows
            ],
            out_specs=pl.BlockSpec((1, C, TD, HW), lambda n, t: (n, 0, t, 0)),
        ),
        compiler_params=pltpu.CompilerParams(
            dimension_semantics=("parallel", "parallel"),
            vmem_limit_bytes=vmem_gate),
        cost_estimate=gate_cost,
    )(x, m_hw, ud)

    return out.reshape(N, C, D, H, W)


# --------------------------- pure-JAX reference ------------------------------

def _reference(x_in, g_in, params):
    N, C, D, H, W = x_in.shape
    Dh, Hh, Wh = D // 2, H // 2, W // 2
    wx, bx = _fold_bn(params["wx"], params["bx"], *params["bn_x"])
    wg, bg = _fold_bn(params["wg"], params["bg"], *params["bn_g"])
    wr, br = _fold_bn(params["wr"], params["br"], *params["bn_r"])
    x_bn = jnp.einsum("ncdhw,ck->nkdhw", x_in, wx) + bx[None, :, None, None, None]
    g_int = jnp.einsum("ncdhw,ck->nkdhw", g_in, wg) + bg[None, :, None, None, None]
    x_int = x_bn.reshape(N, C, Dh, 2, Hh, 2, Wh, 2).mean(axis=(3, 5, 7))
    x_relu = jax.nn.relu(x_int + g_int)
    r = jnp.einsum("ncdhw,ck->nkdhw", x_relu, wr) + br[None, :, None, None, None]
    m = jax.nn.sigmoid(r)[:, 0]
    UD = jnp.asarray(_linear_upsample_matrix(Dh))
    UH = jnp.asarray(_linear_upsample_matrix(Hh))
    UW = jnp.asarray(_linear_upsample_matrix(Wh))
    m_up = jnp.einsum("Dd,Hh,Ww,ndhw->nDHW", UD, UH, UW, m)
    return x_in * m_up[:, None]


# --------------------------------- main ---------------------------------------

if __name__ == "__main__":
    N, C, D, H, W = 2, 4, 8, 16, 16     # channel_num = 4
    key = jax.random.PRNGKey(0)
    k = jax.random.split(key, 8)

    x_in = jax.random.normal(k[0], (N, C, D, H, W), jnp.float32)
    g_in = jax.random.normal(k[1], (N, 2 * C, D // 2, H // 2, W // 2), jnp.float32)

    # Conv3d 1x1x1 weights stored as (Cin, Cout) matmul matrices
    # (== PyTorch weight[:, :, 0, 0, 0].T).  BatchNorm3d at PyTorch init:
    # gamma=1, beta=0, running_mean=0, running_var=1.
    params = {
        "wx": 0.3 * jax.random.normal(k[2], (C, C), jnp.float32),
        "bx": 0.1 * jax.random.normal(k[3], (C,), jnp.float32),
        "wg": 0.3 * jax.random.normal(k[4], (2 * C, C), jnp.float32),
        "bg": 0.1 * jax.random.normal(k[5], (C,), jnp.float32),
        "wr": 0.3 * jax.random.normal(k[6], (C, 1), jnp.float32),
        "br": 0.1 * jax.random.normal(k[7], (1,), jnp.float32),
        "bn_x": (jnp.ones((C,)), jnp.zeros((C,)), jnp.zeros((C,)), jnp.ones((C,))),
        "bn_g": (jnp.ones((C,)), jnp.zeros((C,)), jnp.zeros((C,)), jnp.ones((C,))),
        "bn_r": (jnp.ones((1,)), jnp.zeros((1,)), jnp.zeros((1,)), jnp.ones((1,))),
    }

    out = atten_gate_block(x_in, g_in, params)
    out = jax.block_until_ready(out)

    ref = _reference(x_in, g_in, params)
    assert out.shape == (N, C, D, H, W)
    assert jnp.allclose(out, ref, atol=1e-4, rtol=1e-4), "kernel != reference"

    print("KERNEL_OK")
</pallas_src>

<mosaic_0001>
module attributes {stable_mosaic.version = 11 : i64} {
  func.func @kernel(%arg0: i32, %arg1: memref<61xf32, #tpu.memory_space<smem>>, %arg2: memref<1x4x4x64xf32, #tpu.memory_space<vmem>>, %arg3: memref<1x8x4x64xf32, #tpu.memory_space<vmem>>, %arg4: memref<1x4x64xf32, #tpu.memory_space<vmem>>) attributes {dimension_semantics = [#tpu.dimension_semantics<parallel>], iteration_bounds = array<i64: 2>, scalar_prefetch = 1 : i64, scratch_operands = 0 : i64, tpu.core_type = #tpu.core_type<tc>, window_params = [{transform_indices = @transform_0, window_bounds = array<i64: 1, 4, 4, 64>}, {transform_indices = @transform_1, window_bounds = array<i64: 1, 8, 4, 64>}, {transform_indices = @transform_2, window_bounds = array<i64: 1, 4, 64>}]} {
    %cst = arith.constant 0.000000e+00 : f32
    %0 = vector.broadcast %cst : f32 to vector<4x64xf32>
    %c60 = arith.constant 60 : index
    %1 = memref.load %arg1[%c60] : memref<61xf32, #tpu.memory_space<smem>>
    %2 = vector.broadcast %1 : f32 to vector<4x64xf32>
    %3 = arith.addf %0, %2 : vector<4x64xf32>
    %cst_0 = arith.constant 0.000000e+00 : f32
    %4 = vector.broadcast %cst_0 : f32 to vector<4x64xf32>
    %c16 = arith.constant 16 : index
    %5 = memref.load %arg1[%c16] : memref<61xf32, #tpu.memory_space<smem>>
    %c52 = arith.constant 52 : index
    %6 = memref.load %arg1[%c52] : memref<61xf32, #tpu.memory_space<smem>>
    %7 = arith.addf %5, %6 : f32
    %8 = vector.broadcast %7 : f32 to vector<4x64xf32>
    %9 = arith.addf %4, %8 : vector<4x64xf32>
    %c0 = arith.constant 0 : index
    %10 = memref.load %arg1[%c0] : memref<61xf32, #tpu.memory_space<smem>>
    %c0_1 = arith.constant 0 : index
    %c0_2 = arith.constant 0 : index
    %c0_3 = arith.constant 0 : index
    %c0_4 = arith.constant 0 : index
    %11 = vector.load %arg2[%c0_1, %c0_2, %c0_3, %c0_4] : memref<1x4x4x64xf32, #tpu.memory_space<vmem>>, vector<1x1x4x64xf32>
    %12 = vector.shape_cast %11 : vector<1x1x4x64xf32> to vector<4x64xf32>
    %13 = vector.broadcast %10 : f32 to vector<4x64xf32>
    %14 = arith.mulf %13, %12 : vector<4x64xf32>
    %15 = arith.addf %9, %14 : vector<4x64xf32>
    %c4 = arith.constant 4 : index
    %16 = memref.load %arg1[%c4] : memref<61xf32, #tpu.memory_space<smem>>
    %c0_5 = arith.constant 0 : index
    %c1 = arith.constant 1 : index
    %c0_6 = arith.constant 0 : index
    %c0_7 = arith.constant 0 : index
    %17 = vector.load %arg2[%c0_5, %c1, %c0_6, %c0_7] : memref<1x4x4x64xf32, #tpu.memory_space<vmem>>, vector<1x1x4x64xf32>
    %18 = vector.shape_cast %17 : vector<1x1x4x64xf32> to vector<4x64xf32>
    %19 = vector.broadcast %16 : f32 to vector<4x64xf32>
    %20 = arith.mulf %19, %18 : vector<4x64xf32>
    %21 = arith.addf %15, %20 : vector<4x64xf32>
    %c8 = arith.constant 8 : index
    %22 = memref.load %arg1[%c8] : memref<61xf32, #tpu.memory_space<smem>>
    %c0_8 = arith.constant 0 : index
    %c2 = arith.constant 2 : index
    %c0_9 = arith.constant 0 : index
    %c0_10 = arith.constant 0 : index
    %23 = vector.load %arg2[%c0_8, %c2, %c0_9, %c0_10] : memref<1x4x4x64xf32, #tpu.memory_space<vmem>>, vector<1x1x4x64xf32>
    %24 = vector.shape_cast %23 : vector<1x1x4x64xf32> to vector<4x64xf32>
    %25 = vector.broadcast %22 : f32 to vector<4x64xf32>
    %26 = arith.mulf %25, %24 : vector<4x64xf32>
    %27 = arith.addf %21, %26 : vector<4x64xf32>
    %c12 = arith.constant 12 : index
    %28 = memref.load %arg1[%c12] : memref<61xf32, #tpu.memory_space<smem>>
    %c0_11 = arith.constant 0 : index
    %c3 = arith.constant 3 : index
    %c0_12 = arith.constant 0 : index
    %c0_13 = arith.constant 0 : index
    %29 = vector.load %arg2[%c0_11, %c3, %c0_12, %c0_13] : memref<1x4x4x64xf32, #tpu.memory_space<vmem>>, vector<1x1x4x64xf32>
    %30 = vector.shape_cast %29 : vector<1x1x4x64xf32> to vector<4x64xf32>
    %31 = vector.broadcast %28 : f32 to vector<4x64xf32>
    %32 = arith.mulf %31, %30 : vector<4x64xf32>
    %33 = arith.addf %27, %32 : vector<4x64xf32>
    %c20 = arith.constant 20 : index
    %34 = memref.load %arg1[%c20] : memref<61xf32, #tpu.memory_space<smem>>
    %c0_14 = arith.constant 0 : index
    %c0_15 = arith.constant 0 : index
    %c0_16 = arith.constant 0 : index
    %c0_17 = arith.constant 0 : index
    %35 = vector.load %arg3[%c0_14, %c0_15, %c0_16, %c0_17] : memref<1x8x4x64xf32, #tpu.memory_space<vmem>>, vector<1x1x4x64xf32>
    %36 = vector.shape_cast %35 : vector<1x1x4x64xf32> to vector<4x64xf32>
    %37 = vector.broadcast %34 : f32 to vector<4x64xf32>
    %38 = arith.mulf %37, %36 : vector<4x64xf32>
    %39 = arith.addf %33, %38 : vector<4x64xf32>
    %c24 = arith.constant 24 : index
    %40 = memref.load %arg1[%c24] : memref<61xf32, #tpu.memory_space<smem>>
    %c0_18 = arith.constant 0 : index
    %c1_19 = arith.constant 1 : index
    %c0_20 = arith.constant 0 : index
    %c0_21 = arith.constant 0 : index
    %41 = vector.load %arg3[%c0_18, %c1_19, %c0_20, %c0_21] : memref<1x8x4x64xf32, #tpu.memory_space<vmem>>, vector<1x1x4x64xf32>
    %42 = vector.shape_cast %41 : vector<1x1x4x64xf32> to vector<4x64xf32>
    %43 = vector.broadcast %40 : f32 to vector<4x64xf32>
    %44 = arith.mulf %43, %42 : vector<4x64xf32>
    %45 = arith.addf %39, %44 : vector<4x64xf32>
    %c28 = arith.constant 28 : index
    %46 = memref.load %arg1[%c28] : memref<61xf32, #tpu.memory_space<smem>>
    %c0_22 = arith.constant 0 : index
    %c2_23 = arith.constant 2 : index
    %c0_24 = arith.constant 0 : index
    %c0_25 = arith.constant 0 : index
    %47 = vector.load %arg3[%c0_22, %c2_23, %c0_24, %c0_25] : memref<1x8x4x64xf32, #tpu.memory_space<vmem>>, vector<1x1x4x64xf32>
    %48 = vector.shape_cast %47 : vector<1x1x4x64xf32> to vector<4x64xf32>
    %49 = vector.broadcast %46 : f32 to vector<4x64xf32>
    %50 = arith.mulf %49, %48 : vector<4x64xf32>
    %51 = arith.addf %45, %50 : vector<4x64xf32>
    %c32 = arith.constant 32 : index
    %52 = memref.load %arg1[%c32] : memref<61xf32, #tpu.memory_space<smem>>
    %c0_26 = arith.constant 0 : index
    %c3_27 = arith.constant 3 : index
    %c0_28 = arith.constant 0 : index
    %c0_29 = arith.constant 0 : index
    %53 = vector.load %arg3[%c0_26, %c3_27, %c0_28, %c0_29] : memref<1x8x4x64xf32, #tpu.memory_space<vmem>>, vector<1x1x4x64xf32>
    %54 = vector.shape_cast %53 : vector<1x1x4x64xf32> to vector<4x64xf32>
    %55 = vector.broadcast %52 : f32 to vector<4x64xf32>
    %56 = arith.mulf %55, %54 : vector<4x64xf32>
    %57 = arith.addf %51, %56 : vector<4x64xf32>
    %c36 = arith.constant 36 : index
    %58 = memref.load %arg1[%c36] : memref<61xf32, #tpu.memory_space<smem>>
    %c0_30 = arith.constant 0 : index
    %c4_31 = arith.constant 4 : index
    %c0_32 = arith.constant 0 : index
    %c0_33 = arith.constant 0 : index
    %59 = vector.load %arg3[%c0_30, %c4_31, %c0_32, %c0_33] : memref<1x8x4x64xf32, #tpu.memory_space<vmem>>, vector<1x1x4x64xf32>
    %60 = vector.shape_cast %59 : vector<1x1x4x64xf32> to vector<4x64xf32>
    %61 = vector.broadcast %58 : f32 to vector<4x64xf32>
    %62 = arith.mulf %61, %60 : vector<4x64xf32>
    %63 = arith.addf %57, %62 : vector<4x64xf32>
    %c40 = arith.constant 40 : index
    %64 = memref.load %arg1[%c40] : memref<61xf32, #tpu.memory_space<smem>>
    %c0_34 = arith.constant 0 : index
    %c5 = arith.constant 5 : index
    %c0_35 = arith.constant 0 : index
    %c0_36 = arith.constant 0 : index
    %65 = vector.load %arg3[%c0_34, %c5, %c0_35, %c0_36] : memref<1x8x4x64xf32, #tpu.memory_space<vmem>>, vector<1x1x4x64xf32>
    %66 = vector.shape_cast %65 : vector<1x1x4x64xf32> to vector<4x64xf32>
    %67 = vector.broadcast %64 : f32 to vector<4x64xf32>
    %68 = arith.mulf %67, %66 : vector<4x64xf32>
    %69 = arith.addf %63, %68 : vector<4x64xf32>
    %c44 = arith.constant 44 : index
    %70 = memref.load %arg1[%c44] : memref<61xf32, #tpu.memory_space<smem>>
    %c0_37 = arith.constant 0 : index
    %c6 = arith.constant 6 : index
    %c0_38 = arith.constant 0 : index
    %c0_39 = arith.constant 0 : index
    %71 = vector.load %arg3[%c0_37, %c6, %c0_38, %c0_39] : memref<1x8x4x64xf32, #tpu.memory_space<vmem>>, vector<1x1x4x64xf32>
    %72 = vector.shape_cast %71 : vector<1x1x4x64xf32> to vector<4x64xf32>
    %73 = vector.broadcast %70 : f32 to vector<4x64xf32>
    %74 = arith.mulf %73, %72 : vector<4x64xf32>
    %75 = arith.addf %69, %74 : vector<4x64xf32>
    %c48 = arith.constant 48 : index
    %76 = memref.load %arg1[%c48] : memref<61xf32, #tpu.memory_space<smem>>
    %c0_40 = arith.constant 0 : index
    %c7 = arith.constant 7 : index
    %c0_41 = arith.constant 0 : index
    %c0_42 = arith.constant 0 : index
    %77 = vector.load %arg3[%c0_40, %c7, %c0_41, %c0_42] : memref<1x8x4x64xf32, #tpu.memory_space<vmem>>, vector<1x1x4x64xf32>
    %78 = vector.shape_cast %77 : vector<1x1x4x64xf32> to vector<4x64xf32>
    %79 = vector.broadcast %76 : f32 to vector<4x64xf32>
    %80 = arith.mulf %79, %78 : vector<4x64xf32>
    %81 = arith.addf %75, %80 : vector<4x64xf32>
    %cst_43 = arith.constant 0.000000e+00 : f32
    %82 = vector.broadcast %cst_43 : f32 to vector<4x64xf32>
    %83 = arith.maximumf %81, %82 : vector<4x64xf32>
    %c56 = arith.constant 56 : index
    %84 = memref.load %arg1[%c56] : memref<61xf32, #tpu.memory_space<smem>>
    %85 = vector.broadcast %84 : f32 to vector<4x64xf32>
    %86 = arith.mulf %85, %83 : vector<4x64xf32>
    %87 = arith.addf %3, %86 : vector<4x64xf32>
    %cst_44 = arith.constant 0.000000e+00 : f32
    %88 = vector.broadcast %cst_44 : f32 to vector<4x64xf32>
    %c17 = arith.constant 17 : index
    %89 = memref.load %arg1[%c17] : memref<61xf32, #tpu.memory_space<smem>>
    %c53 = arith.constant 53 : index
    %90 = memref.load %arg1[%c53] : memref<61xf32, #tpu.memory_space<smem>>
    %91 = arith.addf %89, %90 : f32
    %92 = vector.broadcast %91 : f32 to vector<4x64xf32>
    %93 = arith.addf %88, %92 : vector<4x64xf32>
    %c1_45 = arith.constant 1 : index
    %94 = memref.load %arg1[%c1_45] : memref<61xf32, #tpu.memory_space<smem>>
    %c0_46 = arith.constant 0 : index
    %c0_47 = arith.constant 0 : index
    %c0_48 = arith.constant 0 : index
    %c0_49 = arith.constant 0 : index
    %95 = vector.load %arg2[%c0_46, %c0_47, %c0_48, %c0_49] : memref<1x4x4x64xf32, #tpu.memory_space<vmem>>, vector<1x1x4x64xf32>
    %96 = vector.shape_cast %95 : vector<1x1x4x64xf32> to vector<4x64xf32>
    %97 = vector.broadcast %94 : f32 to vector<4x64xf32>
    %98 = arith.mulf %97, %96 : vector<4x64xf32>
    %99 = arith.addf %93, %98 : vector<4x64xf32>
    %c5_50 = arith.constant 5 : index
    %100 = memref.load %arg1[%c5_50] : memref<61xf32, #tpu.memory_space<smem>>
    %c0_51 = arith.constant 0 : index
    %c1_52 = arith.constant 1 : index
    %c0_53 = arith.constant 0 : index
    %c0_54 = arith.constant 0 : index
    %101 = vector.load %arg2[%c0_51, %c1_52, %c0_53, %c0_54] : memref<1x4x4x64xf32, #tpu.memory_space<vmem>>, vector<1x1x4x64xf32>
    %102 = vector.shape_cast %101 : vector<1x1x4x64xf32> to vector<4x64xf32>
    %103 = vector.broadcast %100 : f32 to vector<4x64xf32>
    %104 = arith.mulf %103, %102 : vector<4x64xf32>
    %105 = arith.addf %99, %104 : vector<4x64xf32>
    %c9 = arith.constant 9 : index
    %106 = memref.load %arg1[%c9] : memref<61xf32, #tpu.memory_space<smem>>
    %c0_55 = arith.constant 0 : index
    %c2_56 = arith.constant 2 : index
    %c0_57 = arith.constant 0 : index
    %c0_58 = arith.constant 0 : index
    %107 = vector.load %arg2[%c0_55, %c2_56, %c0_57, %c0_58] : memref<1x4x4x64xf32, #tpu.memory_space<vmem>>, vector<1x1x4x64xf32>
    %108 = vector.shape_cast %107 : vector<1x1x4x64xf32> to vector<4x64xf32>
    %109 = vector.broadcast %106 : f32 to vector<4x64xf32>
    %110 = arith.mulf %109, %108 : vector<4x64xf32>
    %111 = arith.addf %105, %110 : vector<4x64xf32>
    %c13 = arith.constant 13 : index
    %112 = memref.load %arg1[%c13] : memref<61xf32, #tpu.memory_space<smem>>
    %c0_59 = arith.constant 0 : index
    %c3_60 = arith.constant 3 : index
    %c0_61 = arith.constant 0 : index
    %c0_62 = arith.constant 0 : index
    %113 = vector.load %arg2[%c0_59, %c3_60, %c0_61, %c0_62] : memref<1x4x4x64xf32, #tpu.memory_space<vmem>>, vector<1x1x4x64xf32>
    %114 = vector.shape_cast %113 : vector<1x1x4x64xf32> to vector<4x64xf32>
    %115 = vector.broadcast %112 : f32 to vector<4x64xf32>
    %116 = arith.mulf %115, %114 : vector<4x64xf32>
    %117 = arith.addf %111, %116 : vector<4x64xf32>
    %c21 = arith.constant 21 : index
    %118 = memref.load %arg1[%c21] : memref<61xf32, #tpu.memory_space<smem>>
    %c0_63 = arith.constant 0 : index
    %c0_64 = arith.constant 0 : index
    %c0_65 = arith.constant 0 : index
    %c0_66 = arith.constant 0 : index
    %119 = vector.load %arg3[%c0_63, %c0_64, %c0_65, %c0_66] : memref<1x8x4x64xf32, #tpu.memory_space<vmem>>, vector<1x1x4x64xf32>
    %120 = vector.shape_cast %119 : vector<1x1x4x64xf32> to vector<4x64xf32>
    %121 = vector.broadcast %118 : f32 to vector<4x64xf32>
    %122 = arith.mulf %121, %120 : vector<4x64xf32>
    %123 = arith.addf %117, %122 : vector<4x64xf32>
    %c25 = arith.constant 25 : index
    %124 = memref.load %arg1[%c25] : memref<61xf32, #tpu.memory_space<smem>>
    %c0_67 = arith.constant 0 : index
    %c1_68 = arith.constant 1 : index
    %c0_69 = arith.constant 0 : index
    %c0_70 = arith.constant 0 : index
    %125 = vector.load %arg3[%c0_67, %c1_68, %c0_69, %c0_70] : memref<1x8x4x64xf32, #tpu.memory_space<vmem>>, vector<1x1x4x64xf32>
    %126 = vector.shape_cast %125 : vector<1x1x4x64xf32> to vector<4x64xf32>
    %127 = vector.broadcast %124 : f32 to vector<4x64xf32>
    %128 = arith.mulf %127, %126 : vector<4x64xf32>
    %129 = arith.addf %123, %128 : vector<4x64xf32>
    %c29 = arith.constant 29 : index
    %130 = memref.load %arg1[%c29] : memref<61xf32, #tpu.memory_space<smem>>
    %c0_71 = arith.constant 0 : index
    %c2_72 = arith.constant 2 : index
    %c0_73 = arith.constant 0 : index
    %c0_74 = arith.constant 0 : index
    %131 = vector.load %arg3[%c0_71, %c2_72, %c0_73, %c0_74] : memref<1x8x4x64xf32, #tpu.memory_space<vmem>>, vector<1x1x4x64xf32>
    %132 = vector.shape_cast %131 : vector<1x1x4x64xf32> to vector<4x64xf32>
    %133 = vector.broadcast %130 : f32 to vector<4x64xf32>
    %134 = arith.mulf %133, %132 : vector<4x64xf32>
    %135 = arith.addf %129, %134 : vector<4x64xf32>
    %c33 = arith.constant 33 : index
    %136 = memref.load %arg1[%c33] : memref<61xf32, #tpu.memory_space<smem>>
    %c0_75 = arith.constant 0 : index
    %c3_76 = arith.constant 3 : index
    %c0_77 = arith.constant 0 : index
    %c0_78 = arith.constant 0 : index
    %137 = vector.load %arg3[%c0_75, %c3_76, %c0_77, %c0_78] : memref<1x8x4x64xf32, #tpu.memory_space<vmem>>, vector<1x1x4x64xf32>
    %138 = vector.shape_cast %137 : vector<1x1x4x64xf32> to vector<4x64xf32>
    %139 = vector.broadcast %136 : f32 to vector<4x64xf32>
    %140 = arith.mulf %139, %138 : vector<4x64xf32>
    %141 = arith.addf %135, %140 : vector<4x64xf32>
    %c37 = arith.constant 37 : index
    %142 = memref.load %arg1[%c37] : memref<61xf32, #tpu.memory_space<smem>>
    %c0_79 = arith.constant 0 : index
    %c4_80 = arith.constant 4 : index
    %c0_81 = arith.constant 0 : index
    %c0_82 = arith.constant 0 : index
    %143 = vector.load %arg3[%c0_79, %c4_80, %c0_81, %c0_82] : memref<1x8x4x64xf32, #tpu.memory_space<vmem>>, vector<1x1x4x64xf32>
    %144 = vector.shape_cast %143 : vector<1x1x4x64xf32> to vector<4x64xf32>
    %145 = vector.broadcast %142 : f32 to vector<4x64xf32>
    %146 = arith.mulf %145, %144 : vector<4x64xf32>
    %147 = arith.addf %141, %146 : vector<4x64xf32>
    %c41 = arith.constant 41 : index
    %148 = memref.load %arg1[%c41] : memref<61xf32, #tpu.memory_space<smem>>
    %c0_83 = arith.constant 0 : index
    %c5_84 = arith.constant 5 : index
    %c0_85 = arith.constant 0 : index
    %c0_86 = arith.constant 0 : index
    %149 = vector.load %arg3[%c0_83, %c5_84, %c0_85, %c0_86] : memref<1x8x4x64xf32, #tpu.memory_space<vmem>>, vector<1x1x4x64xf32>
    %150 = vector.shape_cast %149 : vector<1x1x4x64xf32> to vector<4x64xf32>
    %151 = vector.broadcast %148 : f32 to vector<4x64xf32>
    %152 = arith.mulf %151, %150 : vector<4x64xf32>
    %153 = arith.addf %147, %152 : vector<4x64xf32>
    %c45 = arith.constant 45 : index
    %154 = memref.load %arg1[%c45] : memref<61xf32, #tpu.memory_space<smem>>
    %c0_87 = arith.constant 0 : index
    %c6_88 = arith.constant 6 : index
    %c0_89 = arith.constant 0 : index
    %c0_90 = arith.constant 0 : index
    %155 = vector.load %arg3[%c0_87, %c6_88, %c0_89, %c0_90] : memref<1x8x4x64xf32, #tpu.memory_space<vmem>>, vector<1x1x4x64xf32>
    %156 = vector.shape_cast %155 : vector<1x1x4x64xf32> to vector<4x64xf32>
    %157 = vector.broadcast %154 : f32 to vector<4x64xf32>
    %158 = arith.mulf %157, %156 : vector<4x64xf32>
    %159 = arith.addf %153, %158 : vector<4x64xf32>
    %c49 = arith.constant 49 : index
    %160 = memref.load %arg1[%c49] : memref<61xf32, #tpu.memory_space<smem>>
    %c0_91 = arith.constant 0 : index
    %c7_92 = arith.constant 7 : index
    %c0_93 = arith.constant 0 : index
    %c0_94 = arith.constant 0 : index
    %161 = vector.load %arg3[%c0_91, %c7_92, %c0_93, %c0_94] : memref<1x8x4x64xf32, #tpu.memory_space<vmem>>, vector<1x1x4x64xf32>
    %162 = vector.shape_cast %161 : vector<1x1x4x64xf32> to vector<4x64xf32>
    %163 = vector.broadcast %160 : f32 to vector<4x64xf32>
    %164 = arith.mulf %163, %162 : vector<4x64xf32>
    %165 = arith.addf %159, %164 : vector<4x64xf32>
    %cst_95 = arith.constant 0.000000e+00 : f32
    %166 = vector.broadcast %cst_95 : f32 to vector<4x64xf32>
    %167 = arith.maximumf %165, %166 : vector<4x64xf32>
    %c57 = arith.constant 57 : index
    %168 = memref.load %arg1[%c57] : memref<61xf32, #tpu.memory_space<smem>>
    %169 = vector.broadcast %168 : f32 to vector<4x64xf32>
    %170 = arith.mulf %169, %167 : vector<4x64xf32>
    %171 = arith.addf %87, %170 : vector<4x64xf32>
    %cst_96 = arith.constant 0.000000e+00 : f32
    %172 = vector.broadcast %cst_96 : f32 to vector<4x64xf32>
    %c18 = arith.constant 18 : index
    %173 = memref.load %arg1[%c18] : memref<61xf32, #tpu.memory_space<smem>>
    %c54 = arith.constant 54 : index
    %174 = memref.load %arg1[%c54] : memref<61xf32, #tpu.memory_space<smem>>
    %175 = arith.addf %173, %174 : f32
    %176 = vector.broadcast %175 : f32 to vector<4x64xf32>
    %177 = arith.addf %172, %176 : vector<4x64xf32>
    %c2_97 = arith.constant 2 : index
    %178 = memref.load %arg1[%c2_97] : memref<61xf32, #tpu.memory_space<smem>>
    %c0_98 = arith.constant 0 : index
    %c0_99 = arith.constant 0 : index
    %c0_100 = arith.constant 0 : index
    %c0_101 = arith.constant 0 : index
    %179 = vector.load %arg2[%c0_98, %c0_99, %c0_100, %c0_101] : memref<1x4x4x64xf32, #tpu.memory_space<vmem>>, vector<1x1x4x64xf32>
    %180 = vector.shape_cast %179 : vector<1x1x4x64xf32> to vector<4x64xf32>
    %181 = vector.broadcast %178 : f32 to vector<4x64xf32>
    %182 = arith.mulf %181, %180 : vector<4x64xf32>
    %183 = arith.addf %177, %182 : vector<4x64xf32>
    %c6_102 = arith.constant 6 : index
    %184 = memref.load %arg1[%c6_102] : memref<61xf32, #tpu.memory_space<smem>>
    %c0_103 = arith.constant 0 : index
    %c1_104 = arith.constant 1 : index
    %c0_105 = arith.constant 0 : index
    %c0_106 = arith.constant 0 : index
    %185 = vector.load %arg2[%c0_103, %c1_104, %c0_105, %c0_106] : memref<1x4x4x64xf32, #tpu.memory_space<vmem>>, vector<1x1x4x64xf32>
    %186 = vector.shape_cast %185 : vector<1x1x4x64xf32> to vector<4x64xf32>
    %187 = vector.broadcast %184 : f32 to vector<4x64xf32>
    %188 = arith.mulf %187, %186 : vector<4x64xf32>
    %189 = arith.addf %183, %188 : vector<4x64xf32>
    %c10 = arith.constant 10 : index
    %190 = memref.load %arg1[%c10] : memref<61xf32, #tpu.memory_space<smem>>
    %c0_107 = arith.constant 0 : index
    %c2_108 = arith.constant 2 : index
    %c0_109 = arith.constant 0 : index
    %c0_110 = arith.constant 0 : index
    %191 = vector.load %arg2[%c0_107, %c2_108, %c0_109, %c0_110] : memref<1x4x4x64xf32, #tpu.memory_space<vmem>>, vector<1x1x4x64xf32>
    %192 = vector.shape_cast %191 : vector<1x1x4x64xf32> to vector<4x64xf32>
    %193 = vector.broadcast %190 : f32 to vector<4x64xf32>
    %194 = arith.mulf %193, %192 : vector<4x64xf32>
    %195 = arith.addf %189, %194 : vector<4x64xf32>
    %c14 = arith.constant 14 : index
    %196 = memref.load %arg1[%c14] : memref<61xf32, #tpu.memory_space<smem>>
    %c0_111 = arith.constant 0 : index
    %c3_112 = arith.constant 3 : index
    %c0_113 = arith.constant 0 : index
    %c0_114 = arith.constant 0 : index
    %197 = vector.load %arg2[%c0_111, %c3_112, %c0_113, %c0_114] : memref<1x4x4x64xf32, #tpu.memory_space<vmem>>, vector<1x1x4x64xf32>
    %198 = vector.shape_cast %197 : vector<1x1x4x64xf32> to vector<4x64xf32>
    %199 = vector.broadcast %196 : f32 to vector<4x64xf32>
    %200 = arith.mulf %199, %198 : vector<4x64xf32>
    %201 = arith.addf %195, %200 : vector<4x64xf32>
    %c22 = arith.constant 22 : index
    %202 = memref.load %arg1[%c22] : memref<61xf32, #tpu.memory_space<smem>>
    %c0_115 = arith.constant 0 : index
    %c0_116 = arith.constant 0 : index
    %c0_117 = arith.constant 0 : index
    %c0_118 = arith.constant 0 : index
    %203 = vector.load %arg3[%c0_115, %c0_116, %c0_117, %c0_118] : memref<1x8x4x64xf32, #tpu.memory_space<vmem>>, vector<1x1x4x64xf32>
    %204 = vector.shape_cast %203 : vector<1x1x4x64xf32> to vector<4x64xf32>
    %205 = vector.broadcast %202 : f32 to vector<4x64xf32>
    %206 = arith.mulf %205, %204 : vector<4x64xf32>
    %207 = arith.addf %201, %206 : vector<4x64xf32>
    %c26 = arith.constant 26 : index
    %208 = memref.load %arg1[%c26] : memref<61xf32, #tpu.memory_space<smem>>
    %c0_119 = arith.constant 0 : index
    %c1_120 = arith.constant 1 : index
    %c0_121 = arith.constant 0 : index
    %c0_122 = arith.constant 0 : index
    %209 = vector.load %arg3[%c0_119, %c1_120, %c0_121, %c0_122] : memref<1x8x4x64xf32, #tpu.memory_space<vmem>>, vector<1x1x4x64xf32>
    %210 = vector.shape_cast %209 : vector<1x1x4x64xf32> to vector<4x64xf32>
    %211 = vector.broadcast %208 : f32 to vector<4x64xf32>
    %212 = arith.mulf %211, %210 : vector<4x64xf32>
    %213 = arith.addf %207, %212 : vector<4x64xf32>
    %c30 = arith.constant 30 : index
    %214 = memref.load %arg1[%c30] : memref<61xf32, #tpu.memory_space<smem>>
    %c0_123 = arith.constant 0 : index
    %c2_124 = arith.constant 2 : index
    %c0_125 = arith.constant 0 : index
    %c0_126 = arith.constant 0 : index
    %215 = vector.load %arg3[%c0_123, %c2_124, %c0_125, %c0_126] : memref<1x8x4x64xf32, #tpu.memory_space<vmem>>, vector<1x1x4x64xf32>
    %216 = vector.shape_cast %215 : vector<1x1x4x64xf32> to vector<4x64xf32>
    %217 = vector.broadcast %214 : f32 to vector<4x64xf32>
    %218 = arith.mulf %217, %216 : vector<4x64xf32>
    %219 = arith.addf %213, %218 : vector<4x64xf32>
    %c34 = arith.constant 34 : index
    %220 = memref.load %arg1[%c34] : memref<61xf32, #tpu.memory_space<smem>>
    %c0_127 = arith.constant 0 : index
    %c3_128 = arith.constant 3 : index
    %c0_129 = arith.constant 0 : index
    %c0_130 = arith.constant 0 : index
    %221 = vector.load %arg3[%c0_127, %c3_128, %c0_129, %c0_130] : memref<1x8x4x64xf32, #tpu.memory_space<vmem>>, vector<1x1x4x64xf32>
    %222 = vector.shape_cast %221 : vector<1x1x4x64xf32> to vector<4x64xf32>
    %223 = vector.broadcast %220 : f32 to vector<4x64xf32>
    %224 = arith.mulf %223, %222 : vector<4x64xf32>
    %225 = arith.addf %219, %224 : vector<4x64xf32>
    %c38 = arith.constant 38 : index
    %226 = memref.load %arg1[%c38] : memref<61xf32, #tpu.memory_space<smem>>
    %c0_131 = arith.constant 0 : index
    %c4_132 = arith.constant 4 : index
    %c0_133 = arith.constant 0 : index
    %c0_134 = arith.constant 0 : index
    %227 = vector.load %arg3[%c0_131, %c4_132, %c0_133, %c0_134] : memref<1x8x4x64xf32, #tpu.memory_space<vmem>>, vector<1x1x4x64xf32>
    %228 = vector.shape_cast %227 : vector<1x1x4x64xf32> to vector<4x64xf32>
    %229 = vector.broadcast %226 : f32 to vector<4x64xf32>
    %230 = arith.mulf %229, %228 : vector<4x64xf32>
    %231 = arith.addf %225, %230 : vector<4x64xf32>
    %c42 = arith.constant 42 : index
    %232 = memref.load %arg1[%c42] : memref<61xf32, #tpu.memory_space<smem>>
    %c0_135 = arith.constant 0 : index
    %c5_136 = arith.constant 5 : index
    %c0_137 = arith.constant 0 : index
    %c0_138 = arith.constant 0 : index
    %233 = vector.load %arg3[%c0_135, %c5_136, %c0_137, %c0_138] : memref<1x8x4x64xf32, #tpu.memory_space<vmem>>, vector<1x1x4x64xf32>
    %234 = vector.shape_cast %233 : vector<1x1x4x64xf32> to vector<4x64xf32>
    %235 = vector.broadcast %232 : f32 to vector<4x64xf32>
    %236 = arith.mulf %235, %234 : vector<4x64xf32>
    %237 = arith.addf %231, %236 : vector<4x64xf32>
    %c46 = arith.constant 46 : index
    %238 = memref.load %arg1[%c46] : memref<61xf32, #tpu.memory_space<smem>>
    %c0_139 = arith.constant 0 : index
    %c6_140 = arith.constant 6 : index
    %c0_141 = arith.constant 0 : index
    %c0_142 = arith.constant 0 : index
    %239 = vector.load %arg3[%c0_139, %c6_140, %c0_141, %c0_142] : memref<1x8x4x64xf32, #tpu.memory_space<vmem>>, vector<1x1x4x64xf32>
    %240 = vector.shape_cast %239 : vector<1x1x4x64xf32> to vector<4x64xf32>
    %241 = vector.broadcast %238 : f32 to vector<4x64xf32>
    %242 = arith.mulf %241, %240 : vector<4x64xf32>
    %243 = arith.addf %237, %242 : vector<4x64xf32>
    %c50 = arith.constant 50 : index
    %244 = memref.load %arg1[%c50] : memref<61xf32, #tpu.memory_space<smem>>
    %c0_143 = arith.constant 0 : index
    %c7_144 = arith.constant 7 : index
    %c0_145 = arith.constant 0 : index
    %c0_146 = arith.constant 0 : index
    %245 = vector.load %arg3[%c0_143, %c7_144, %c0_145, %c0_146] : memref<1x8x4x64xf32, #tpu.memory_space<vmem>>, vector<1x1x4x64xf32>
    %246 = vector.shape_cast %245 : vector<1x1x4x64xf32> to vector<4x64xf32>
    %247 = vector.broadcast %244 : f32 to vector<4x64xf32>
    %248 = arith.mulf %247, %246 : vector<4x64xf32>
    %249 = arith.addf %243, %248 : vector<4x64xf32>
    %cst_147 = arith.constant 0.000000e+00 : f32
    %250 = vector.broadcast %cst_147 : f32 to vector<4x64xf32>
    %251 = arith.maximumf %249, %250 : vector<4x64xf32>
    %c58 = arith.constant 58 : index
    %252 = memref.load %arg1[%c58] : memref<61xf32, #tpu.memory_space<smem>>
    %253 = vector.broadcast %252 : f32 to vector<4x64xf32>
    %254 = arith.mulf %253, %251 : vector<4x64xf32>
    %255 = arith.addf %171, %254 : vector<4x64xf32>
    %cst_148 = arith.constant 0.000000e+00 : f32
    %256 = vector.broadcast %cst_148 : f32 to vector<4x64xf32>
    %c19 = arith.constant 19 : index
    %257 = memref.load %arg1[%c19] : memref<61xf32, #tpu.memory_space<smem>>
    %c55 = arith.constant 55 : index
    %258 = memref.load %arg1[%c55] : memref<61xf32, #tpu.memory_space<smem>>
    %259 = arith.addf %257, %258 : f32
    %260 = vector.broadcast %259 : f32 to vector<4x64xf32>
    %261 = arith.addf %256, %260 : vector<4x64xf32>
    %c3_149 = arith.constant 3 : index
    %262 = memref.load %arg1[%c3_149] : memref<61xf32, #tpu.memory_space<smem>>
    %c0_150 = arith.constant 0 : index
    %c0_151 = arith.constant 0 : index
    %c0_152 = arith.constant 0 : index
    %c0_153 = arith.constant 0 : index
    %263 = vector.load %arg2[%c0_150, %c0_151, %c0_152, %c0_153] : memref<1x4x4x64xf32, #tpu.memory_space<vmem>>, vector<1x1x4x64xf32>
    %264 = vector.shape_cast %263 : vector<1x1x4x64xf32> to vector<4x64xf32>
    %265 = vector.broadcast %262 : f32 to vector<4x64xf32>
    %266 = arith.mulf %265, %264 : vector<4x64xf32>
    %267 = arith.addf %261, %266 : vector<4x64xf32>
    %c7_154 = arith.constant 7 : index
    %268 = memref.load %arg1[%c7_154] : memref<61xf32, #tpu.memory_space<smem>>
    %c0_155 = arith.constant 0 : index
    %c1_156 = arith.constant 1 : index
    %c0_157 = arith.constant 0 : index
    %c0_158 = arith.constant 0 : index
    %269 = vector.load %arg2[%c0_155, %c1_156, %c0_157, %c0_158] : memref<1x4x4x64xf32, #tpu.memory_space<vmem>>, vector<1x1x4x64xf32>
    %270 = vector.shape_cast %269 : vector<1x1x4x64xf32> to vector<4x64xf32>
    %271 = vector.broadcast %268 : f32 to vector<4x64xf32>
    %272 = arith.mulf %271, %270 : vector<4x64xf32>
    %273 = arith.addf %267, %272 : vector<4x64xf32>
    %c11 = arith.constant 11 : index
    %274 = memref.load %arg1[%c11] : memref<61xf32, #tpu.memory_space<smem>>
    %c0_159 = arith.constant 0 : index
    %c2_160 = arith.constant 2 : index
    %c0_161 = arith.constant 0 : index
    %c0_162 = arith.constant 0 : index
    %275 = vector.load %arg2[%c0_159, %c2_160, %c0_161, %c0_162] : memref<1x4x4x64xf32, #tpu.memory_space<vmem>>, vector<1x1x4x64xf32>
    %276 = vector.shape_cast %275 : vector<1x1x4x64xf32> to vector<4x64xf32>
    %277 = vector.broadcast %274 : f32 to vector<4x64xf32>
    %278 = arith.mulf %277, %276 : vector<4x64xf32>
    %279 = arith.addf %273, %278 : vector<4x64xf32>
    %c15 = arith.constant 15 : index
    %280 = memref.load %arg1[%c15] : memref<61xf32, #tpu.memory_space<smem>>
    %c0_163 = arith.constant 0 : index
    %c3_164 = arith.constant 3 : index
    %c0_165 = arith.constant 0 : index
    %c0_166 = arith.constant 0 : index
    %281 = vector.load %arg2[%c0_163, %c3_164, %c0_165, %c0_166] : memref<1x4x4x64xf32, #tpu.memory_space<vmem>>, vector<1x1x4x64xf32>
    %282 = vector.shape_cast %281 : vector<1x1x4x64xf32> to vector<4x64xf32>
    %283 = vector.broadcast %280 : f32 to vector<4x64xf32>
    %284 = arith.mulf %283, %282 : vector<4x64xf32>
    %285 = arith.addf %279, %284 : vector<4x64xf32>
    %c23 = arith.constant 23 : index
    %286 = memref.load %arg1[%c23] : memref<61xf32, #tpu.memory_space<smem>>
    %c0_167 = arith.constant 0 : index
    %c0_168 = arith.constant 0 : index
    %c0_169 = arith.constant 0 : index
    %c0_170 = arith.constant 0 : index
    %287 = vector.load %arg3[%c0_167, %c0_168, %c0_169, %c0_170] : memref<1x8x4x64xf32, #tpu.memory_space<vmem>>, vector<1x1x4x64xf32>
    %288 = vector.shape_cast %287 : vector<1x1x4x64xf32> to vector<4x64xf32>
    %289 = vector.broadcast %286 : f32 to vector<4x64xf32>
    %290 = arith.mulf %289, %288 : vector<4x64xf32>
    %291 = arith.addf %285, %290 : vector<4x64xf32>
    %c27 = arith.constant 27 : index
    %292 = memref.load %arg1[%c27] : memref<61xf32, #tpu.memory_space<smem>>
    %c0_171 = arith.constant 0 : index
    %c1_172 = arith.constant 1 : index
    %c0_173 = arith.constant 0 : index
    %c0_174 = arith.constant 0 : index
    %293 = vector.load %arg3[%c0_171, %c1_172, %c0_173, %c0_174] : memref<1x8x4x64xf32, #tpu.memory_space<vmem>>, vector<1x1x4x64xf32>
    %294 = vector.shape_cast %293 : vector<1x1x4x64xf32> to vector<4x64xf32>
    %295 = vector.broadcast %292 : f32 to vector<4x64xf32>
    %296 = arith.mulf %295, %294 : vector<4x64xf32>
    %297 = arith.addf %291, %296 : vector<4x64xf32>
    %c31 = arith.constant 31 : index
    %298 = memref.load %arg1[%c31] : memref<61xf32, #tpu.memory_space<smem>>
    %c0_175 = arith.constant 0 : index
    %c2_176 = arith.constant 2 : index
    %c0_177 = arith.constant 0 : index
    %c0_178 = arith.constant 0 : index
    %299 = vector.load %arg3[%c0_175, %c2_176, %c0_177, %c0_178] : memref<1x8x4x64xf32, #tpu.memory_space<vmem>>, vector<1x1x4x64xf32>
    %300 = vector.shape_cast %299 : vector<1x1x4x64xf32> to vector<4x64xf32>
    %301 = vector.broadcast %298 : f32 to vector<4x64xf32>
    %302 = arith.mulf %301, %300 : vector<4x64xf32>
    %303 = arith.addf %297, %302 : vector<4x64xf32>
    %c35 = arith.constant 35 : index
    %304 = memref.load %arg1[%c35] : memref<61xf32, #tpu.memory_space<smem>>
    %c0_179 = arith.constant 0 : index
    %c3_180 = arith.constant 3 : index
    %c0_181 = arith.constant 0 : index
    %c0_182 = arith.constant 0 : index
    %305 = vector.load %arg3[%c0_179, %c3_180, %c0_181, %c0_182] : memref<1x8x4x64xf32, #tpu.memory_space<vmem>>, vector<1x1x4x64xf32>
    %306 = vector.shape_cast %305 : vector<1x1x4x64xf32> to vector<4x64xf32>
    %307 = vector.broadcast %304 : f32 to vector<4x64xf32>
    %308 = arith.mulf %307, %306 : vector<4x64xf32>
    %309 = arith.addf %303, %308 : vector<4x64xf32>
    %c39 = arith.constant 39 : index
    %310 = memref.load %arg1[%c39] : memref<61xf32, #tpu.memory_space<smem>>
    %c0_183 = arith.constant 0 : index
    %c4_184 = arith.constant 4 : index
    %c0_185 = arith.constant 0 : index
    %c0_186 = arith.constant 0 : index
    %311 = vector.load %arg3[%c0_183, %c4_184, %c0_185, %c0_186] : memref<1x8x4x64xf32, #tpu.memory_space<vmem>>, vector<1x1x4x64xf32>
    %312 = vector.shape_cast %311 : vector<1x1x4x64xf32> to vector<4x64xf32>
    %313 = vector.broadcast %310 : f32 to vector<4x64xf32>
    %314 = arith.mulf %313, %312 : vector<4x64xf32>
    %315 = arith.addf %309, %314 : vector<4x64xf32>
    %c43 = arith.constant 43 : index
    %316 = memref.load %arg1[%c43] : memref<61xf32, #tpu.memory_space<smem>>
    %c0_187 = arith.constant 0 : index
    %c5_188 = arith.constant 5 : index
    %c0_189 = arith.constant 0 : index
    %c0_190 = arith.constant 0 : index
    %317 = vector.load %arg3[%c0_187, %c5_188, %c0_189, %c0_190] : memref<1x8x4x64xf32, #tpu.memory_space<vmem>>, vector<1x1x4x64xf32>
    %318 = vector.shape_cast %317 : vector<1x1x4x64xf32> to vector<4x64xf32>
    %319 = vector.broadcast %316 : f32 to vector<4x64xf32>
    %320 = arith.mulf %319, %318 : vector<4x64xf32>
    %321 = arith.addf %315, %320 : vector<4x64xf32>
    %c47 = arith.constant 47 : index
    %322 = memref.load %arg1[%c47] : memref<61xf32, #tpu.memory_space<smem>>
    %c0_191 = arith.constant 0 : index
    %c6_192 = arith.constant 6 : index
    %c0_193 = arith.constant 0 : index
    %c0_194 = arith.constant 0 : index
    %323 = vector.load %arg3[%c0_191, %c6_192, %c0_193, %c0_194] : memref<1x8x4x64xf32, #tpu.memory_space<vmem>>, vector<1x1x4x64xf32>
    %324 = vector.shape_cast %323 : vector<1x1x4x64xf32> to vector<4x64xf32>
    %325 = vector.broadcast %322 : f32 to vector<4x64xf32>
    %326 = arith.mulf %325, %324 : vector<4x64xf32>
    %327 = arith.addf %321, %326 : vector<4x64xf32>
    %c51 = arith.constant 51 : index
    %328 = memref.load %arg1[%c51] : memref<61xf32, #tpu.memory_space<smem>>
    %c0_195 = arith.constant 0 : index
    %c7_196 = arith.constant 7 : index
    %c0_197 = arith.constant 0 : index
    %c0_198 = arith.constant 0 : index
    %329 = vector.load %arg3[%c0_195, %c7_196, %c0_197, %c0_198] : memref<1x8x4x64xf32, #tpu.memory_space<vmem>>, vector<1x1x4x64xf32>
    %330 = vector.shape_cast %329 : vector<1x1x4x64xf32> to vector<4x64xf32>
    %331 = vector.broadcast %328 : f32 to vector<4x64xf32>
    %332 = arith.mulf %331, %330 : vector<4x64xf32>
    %333 = arith.addf %327, %332 : vector<4x64xf32>
    %cst_199 = arith.constant 0.000000e+00 : f32
    %334 = vector.broadcast %cst_199 : f32 to vector<4x64xf32>
    %335 = arith.maximumf %333, %334 : vector<4x64xf32>
    %c59 = arith.constant 59 : index
    %336 = memref.load %arg1[%c59] : memref<61xf32, #tpu.memory_space<smem>>
    %337 = vector.broadcast %336 : f32 to vector<4x64xf32>
    %338 = arith.mulf %337, %335 : vector<4x64xf32>
    %339 = arith.addf %255, %338 : vector<4x64xf32>
    %cst_200 = arith.constant 0.000000e+00 : f32
    %340 = vector.broadcast %cst_200 : f32 to vector<4x64xf32>
    %341 = arith.subf %340, %339 : vector<4x64xf32>
    %342 = math.exp %341 : vector<4x64xf32>
    %cst_201 = arith.constant 1.000000e+00 : f32
    %343 = vector.broadcast %cst_201 : f32 to vector<4x64xf32>
    %344 = arith.addf %343, %342 : vector<4x64xf32>
    %cst_202 = arith.constant 1.000000e+00 : f32
    %345 = vector.broadcast %cst_202 : f32 to vector<4x64xf32>
    %346 = arith.divf %345, %344 : vector<4x64xf32>
    %c0_203 = arith.constant 0 : index
    %c0_204 = arith.constant 0 : index
    %c0_205 = arith.constant 0 : index
    %347 = vector.load %arg4[%c0_203, %c0_204, %c0_205] : memref<1x4x64xf32, #tpu.memory_space<vmem>>, vector<1x4x64xf32>
    %348 = vector.shape_cast %347 : vector<1x4x64xf32> to vector<4x64xf32>
    %349 = vector.shape_cast %346 : vector<4x64xf32> to vector<1x4x64xf32>
    tpu.vector_store %arg4[%c0_203, %c0_204, %c0_205], %349 {strides = array<i32>} : memref<1x4x64xf32, #tpu.memory_space<vmem>>, vector<1x4x64xf32>,
    return
  }
  func.func @transform_0(%arg0: i32, %arg1: memref<61xf32, #tpu.memory_space<smem>>) -> (i32, i32, i32, i32) {
    %c0_i32 = arith.constant 0 : i32
    %c0_i32_0 = arith.constant 0 : i32
    %c0_i32_1 = arith.constant 0 : i32
    %c0_i32_2 = arith.constant 0 : i32
    return %arg0, %c0_i32, %c0_i32_0, %c0_i32_1 : i32, i32, i32, i32
  }
  func.func @transform_1(%arg0: i32, %arg1: memref<61xf32, #tpu.memory_space<smem>>) -> (i32, i32, i32, i32) {
    %c0_i32 = arith.constant 0 : i32
    %c0_i32_0 = arith.constant 0 : i32
    %c0_i32_1 = arith.constant 0 : i32
    %c0_i32_2 = arith.constant 0 : i32
    return %arg0, %c0_i32, %c0_i32_0, %c0_i32_1 : i32, i32, i32, i32
  }
  func.func @transform_2(%arg0: i32, %arg1: memref<61xf32, #tpu.memory_space<smem>>) -> (i32, i32, i32) {
    %c0_i32 = arith.constant 0 : i32
    %c0_i32_0 = arith.constant 0 : i32
    %c0_i32_1 = arith.constant 0 : i32
    return %arg0, %c0_i32, %c0_i32_0 : i32, i32, i32
  }
}

</mosaic_0001>

<llo_original>
// kernel: tpu_custom_call.1
$region0: #{tpu_custom_call.1}
  #allocation0 [shape = 'u32[]', space=smem, size = 0x4, offset = 0x4, fixed_abs, tag = 'smem constant byte address 0x4 - core index']
  #allocation1 [shape = 'u32[144,128]{1,0:T(1,128)}', space=vmem, size = 0x12000, scoped, tag = 'internal scratch']
  #allocation2 [shape = 's32[1]{0}', space=sflag, size = 0x4, scoped, tag = 'scoped memory for tpu_custom_call.1']
  #allocation3 [shape = 'u8[512]{0}', space=smem, size = 0x200, scoped, tag = 'prefetched SMEM operand 0']
  %s0 = inlined_call_operand.hbm [shape: f32[61], index: 0, kind: input, shape index: {}]
  %s1 = inlined_call_operand.hbm [shape: f32[2,4,4,64], index: 1, kind: input, shape index: {}]
  %s2 = inlined_call_operand.hbm [shape: f32[2,8,4,64], index: 2, kind: input, shape index: {}]
  %s3 = inlined_call_operand.hbm [shape: f32[2,4,64], index: 3, kind: output, shape index: {}]
  %s4 = sld [smem:[#allocation0]]
  $region49: #{tpu_custom_call.1} parent=0
    _
  %s6 = ssub.s32 1, %s4
  %s7 = scalar_select 0, %s6, %s4
  %9 = dma.hbm_to_smem %s0, 16, [#allocation3], [#allocation2]
  %10 = dma.done [#allocation2], 16
  %11 = sfence
  $region1: #{tpu_custom_call.1} parent=0
    #allocation4 [shape = 'u8[16384]{0}', space=vmem, size = 0x4000, scoped, tag = 'input window, operand 1']
    #allocation5 [shape = 's32[2]{0}', space=sflag, size = 0x8, scoped, tag = 'scoped memory for tpu_custom_call.1']
    #allocation6 [shape = 's32[2]{0}', space=sflag, size = 0x8, scoped, tag = 'scoped memory for tpu_custom_call.1']
    #allocation7 [shape = 'u8[32768]{0}', space=vmem, size = 0x8000, scoped, tag = 'input window, operand 2']
    #allocation8 [shape = 's32[2]{0}', space=sflag, size = 0x8, scoped, tag = 'scoped memory for tpu_custom_call.1']
    #allocation9 [shape = 'u8[4096]{0}', space=vmem, size = 0x1000, scoped, tag = 'output window, operand 0']
    %12 = vsyncpa [#allocation5], 0
    %s13 = scalar_lea.sflag [#allocation5], 1
    %14 = vsyncpa %s13, 0
    %15 = vsyncpa [#allocation8], 0
    %s16 = scalar_lea.sflag [#allocation8], 1
    %17 = vsyncpa %s16, 0
    %18 = vsyncpa [#allocation6], 0
    %s19 = scalar_lea.sflag [#allocation6], 1
    %20 = vsyncpa %s19, 0
    loop: start=0, step=1, limit=4
    $region2: #{tpu_custom_call.1} parent=1 // loop_pre_header
      _
    $region3: #{tpu_custom_call.1} parent=1 // loop_header
      %s22 = sphi 0, %s26
      %p23 = scmp.ge.s32.totalorder %s22, 4
      %s32 = sphi 0, %s34
      %s35 = sphi 0, %s32
      %s36 = sphi 0, %s35
      %s52 = sphi 0, %s36
      %s58 = sphi 0, %s60
      %s61 = sphi 0, %s58
      %s62 = sphi 0, %s61
      %s78 = sphi 0, %s62
      %s84 = sphi 0, %s86
      %s87 = sphi 0, %s84
      %s88 = sphi 0, %s87
      %s104 = sphi 0, %s88
    $region4: #{tpu_custom_call.1} parent=1 // loop_header_branch
      %25 = sbr.rel (%p23) target = $region8
    $region5: #{tpu_custom_call.1} parent=1 // loop_body
      %s27 = ssub.s32 %s22, 1
      %s28 = ssub.s32 %s22, 2
      %s29 = sadd.s32 %s22, 1
      %s30 = ssub.s32 %s22, %s29
      %p31 = scmp.eq.s32.totalorder %s30, 0
      %s33 = sadd.s32 %s32, 1
      %s34 = scalar_select %p31, %s32, %s33
      %p37 = pneg %p31
      %p38 = scmp.eq.s32.totalorder %s22, 1
      %p39 = por %p37, %p38
      %p40 = scmp.ne.s32.totalorder %s32, %s35
      %p41 = scmp.eq.s32.totalorder %s22, 0
      %p42 = por %p40, %p41
      %p43 = scmp.ne.s32.totalorder %s32, %s35
      %p44 = scmp.eq.s32.totalorder %s27, 1
      %p45 = por %p43, %p44
      %p46 = scmp.ne.s32.totalorder %s35, %s36
      %p47 = scmp.eq.s32.totalorder %s27, 0
      %p48 = por %p46, %p47
      %p49 = scmp.ne.s32.totalorder %s35, %s36
      %p50 = scmp.eq.s32.totalorder %s28, 1
      %p51 = por %p49, %p50
      %p53 = scmp.ne.s32.totalorder %s36, %s52
      %p54 = scmp.eq.s32.totalorder %s28, 0
      %p55 = por %p53, %p54
      %s56 = ssub.s32 %s22, %s29
      %p57 = scmp.eq.s32.totalorder %s56, 0
      %s59 = sadd.s32 %s58, 1
      %s60 = scalar_select %p57, %s58, %s59
      %p63 = pneg %p57
      %p64 = scmp.eq.s32.totalorder %s22, 1
      %p65 = por %p63, %p64
      %p66 = scmp.ne.s32.totalorder %s58, %s61
      %p67 = scmp.eq.s32.totalorder %s22, 0
      %p68 = por %p66, %p67
      %p69 = scmp.ne.s32.totalorder %s58, %s61
      %p70 = scmp.eq.s32.totalorder %s27, 1
      %p71 = por %p69, %p70
      %p72 = scmp.ne.s32.totalorder %s61, %s62
      %p73 = scmp.eq.s32.totalorder %s27, 0
      %p74 = por %p72, %p73
      %p75 = scmp.ne.s32.totalorder %s61, %s62
      %p76 = scmp.eq.s32.totalorder %s28, 1
      %p77 = por %p75, %p76
      %p79 = scmp.ne.s32.totalorder %s62, %s78
      %p80 = scmp.eq.s32.totalorder %s28, 0
      %p81 = por %p79, %p80
      %s82 = ssub.s32 %s22, %s29
      %p83 = scmp.eq.s32.totalorder %s82, 0
      %s85 = sadd.s32 %s84, 1
      %s86 = scalar_select %p83, %s84, %s85
      %p89 = pneg %p83
      %p90 = scmp.eq.s32.totalorder %s22, 1
      %p91 = por %p89, %p90
      %p92 = scmp.ne.s32.totalorder %s84, %s87
      %p93 = scmp.eq.s32.totalorder %s22, 0
      %p94 = por %p92, %p93
      %p95 = scmp.ne.s32.totalorder %s84, %s87
      %p96 = scmp.eq.s32.totalorder %s27, 1
      %p97 = por %p95, %p96
      %p98 = scmp.ne.s32.totalorder %s87, %s88
      %p99 = scmp.eq.s32.totalorder %s27, 0
      %p100 = por %p98, %p99
      %p101 = scmp.ne.s32.totalorder %s87, %s88
      %p102 = scmp.eq.s32.totalorder %s28, 1
      %p103 = por %p101, %p102
      %p105 = scmp.ne.s32.totalorder %s88, %s104
      %p106 = scmp.eq.s32.totalorder %s28, 0
      %p107 = por %p105, %p106
      %p108 = scmp.le.s32.totalorder 1, %s22
      %p109 = scmp.lt.s32.totalorder %s22, 3
      %p110 = pnand %p108, %p109
      %p111 = pneg %p110
      // Predicated region
      $region9: #{tpu_custom_call.1} parent=5 // pred_check
        _
      $region10: #{tpu_custom_call.1} parent=5 // pred_check_branch
        %113 = sbr.rel (%p110) target = $region12
      $region11: #{tpu_custom_call.1} parent=5 // pred_region
        %s114 = ssub.s32 %s22, 1
      $region12: #{tpu_custom_call.1} parent=5 // pred_fallthru
        _
      %p115 = scmp.lt.s32.totalorder %s22, 2
      // Predicated region
      $region13: #{tpu_custom_call.1} parent=5 // pred_check
        %p116 = pneg %p115
      $region14: #{tpu_custom_call.1} parent=5 // pred_check_branch
        %118 = sbr.rel (%p116) target = $region16
      $region15: #{tpu_custom_call.1} parent=5 // pred_region
        // Predicated region
        $region17: #{tpu_custom_call.1} parent=15 // pred_check
          %p119 = pneg %p42
        $region18: #{tpu_custom_call.1} parent=15 // pred_check_branch
          %121 = sbr.rel (%p119) target = $region20
        $region19: #{tpu_custom_call.1} parent=15 // pred_region
          %s122 = sand.u32 %s32, 1
          %s123 = scalar_lea.sflag [#allocation5], %s122
          %s124 = sand.u32 %s32, 1
          %s125 = smul.addr %s124, 16
          %s126 = scalar_lea.vmem [#allocation4], %s125
          %s128 = ssub.s32 256, 256
          %129 = vsyncadd %s123, %s128
          %s130 = smul.addr %s22, 4
          %s131 = smul.addr %s130, 64
          %s132 = scalar_lea.hbm %s1, %s131
          %s133 = sshll.u32 %s126, 4
          %s134 = int_to_ptr.vmem [resolvable:$true] %s133
          %139 = dma.hbm_to_vmem [thread:$0]  %s132, 256, %s134, %s123, 64, 64, 4
        $region20: #{tpu_custom_call.1} parent=15 // pred_fallthru
          _
        // Predicated region
        $region21: #{tpu_custom_call.1} parent=15 // pred_check
          %p140 = pneg %p68
        $region22: #{tpu_custom_call.1} parent=15 // pred_check_branch
          %142 = sbr.rel (%p140) target = $region24
        $region23: #{tpu_custom_call.1} parent=15 // pred_region
          %s143 = sand.u32 %s58, 1
          %s144 = scalar_lea.sflag [#allocation8], %s143
          %s145 = sand.u32 %s58, 1
          %s146 = smul.addr %s145, 32
          %s147 = scalar_lea.vmem [#allocation7], %s146
          %s149 = ssub.s32 512, 512
          %150 = vsyncadd %s144, %s149
          %s151 = smul.addr %s22, 8
          %s152 = smul.addr %s151, 64
          %s153 = scalar_lea.hbm %s2, %s152
          %s154 = sshll.u32 %s147, 4
          %s155 = int_to_ptr.vmem [resolvable:$true] %s154
          %160 = dma.hbm_to_vmem [thread:$0]  %s153, 512, %s155, %s144, 64, 64, 4
        $region24: #{tpu_custom_call.1} parent=15 // pred_fallthru
          _
      $region16: #{tpu_custom_call.1} parent=5 // pred_fallthru
        _
      %p161 = scmp.le.s32.totalorder 1, %s22
      %p162 = scmp.lt.s32.totalorder %s22, 3
      %p163 = pnand %p161, %p162
      %p164 = pneg %p163
      // Predicated region
      $region25: #{tpu_custom_call.1} parent=5 // pred_check
        _
      $region26: #{tpu_custom_call.1} parent=5 // pred_check_branch
        %166 = sbr.rel (%p163) target = $region28
      $region27: #{tpu_custom_call.1} parent=5 // pred_region
        %s167 = ssub.s32 %s22, 1
        %s168 = sand.u32 %s35, 1
        %s169 = scalar_lea.sflag [#allocation5], %s168
        %s170 = sand.u32 %s35, 1
        %s171 = smul.addr %s170, 16
        %s172 = scalar_lea.vmem [#allocation4], %s171
        // Predicated region
        $region29: #{tpu_custom_call.1} parent=27 // pred_check
          %p173 = pneg %p48
        $region30: #{tpu_custom_call.1} parent=27 // pred_check_branch
          %175 = sbr.rel (%p173) target = $region32
        $region31: #{tpu_custom_call.1} parent=27 // pred_region
          %176 = dma.done %s169, 256
        $region32: #{tpu_custom_call.1} parent=27 // pred_fallthru
          _
        %s177 = sand.u32 %s61, 1
        %s178 = scalar_lea.sflag [#allocation8], %s177
        %s179 = sand.u32 %s61, 1
        %s180 = smul.addr %s179, 32
        %s181 = scalar_lea.vmem [#allocation7], %s180
        // Predicated region
        $region33: #{tpu_custom_call.1} parent=27 // pred_check
          %p182 = pneg %p74
        $region34: #{tpu_custom_call.1} parent=27 // pred_check_branch
          %184 = sbr.rel (%p182) target = $region36
        $region35: #{tpu_custom_call.1} parent=27 // pred_region
          %185 = dma.done %s178, 512
        $region36: #{tpu_custom_call.1} parent=27 // pred_fallthru
          _
        %s186 = sand.u32 %s35, 1
        %s187 = scalar_lea.sflag [#allocation5], %s186
        %s188 = sand.u32 %s35, 1
        %s189 = smul.addr %s188, 16
        %s190 = scalar_lea.vmem [#allocation4], %s189
        %p191 = pneg %p48
        %p192 = pneg %p45
        %s193 = sand.u32 %s61, 1
        %s194 = scalar_lea.sflag [#allocation8], %s193
        %s195 = sand.u32 %s61, 1
        %s196 = smul.addr %s195, 32
        %s197 = scalar_lea.vmem [#allocation7], %s196
        %p198 = pneg %p74
        %p199 = pneg %p71
        %p200 = pneg %p100
        %p201 = pneg %p97
        %s202 = sand.u32 %s87, 1
        %s203 = scalar_lea.sflag [#allocation6], %s202
        %s204 = sand.u32 %s87, 1
        %s205 = smul.addr %s204, 4
        %s206 = scalar_lea.vmem [#allocation9], %s205
        %s207 = sld [smem:[#allocation3 + $0x3c]]
        %v208 = vstv %s207
        %v209 = vadd.f32 %v208, 0.0
        %s210 = sld [smem:[#allocation3 + $0x10]]
        %s211 = sld [smem:[#allocation3 + $0x34]]
        %s212 = sadd.f32 %s210, %s211
        %v213 = vstv %s212
        %v214 = vadd.f32 %v213, 0.0
        %s215 = sld [smem:[#allocation3]]
        %v216 = vld [vmem:[%s172] sm:$0xf]
        %v217 = vstv %s215
        %v218 = vmul.f32 %v217, %v216
        %v219 = vadd.f32 %v214, %v218
        %s220 = sld [smem:[#allocation3 + $0x4]]
        %s221 = scalar_lea.vmem %s172, 4 [#allocation4]
        %v222 = vld [vmem:[%s221] sm:$0xf]
        %v223 = vstv %s220
        %v224 = vmul.f32 %v223, %v222
        %v225 = vadd.f32 %v219, %v224
        %s226 = sld [smem:[#allocation3 + $0x8]]
        %s227 = scalar_lea.vmem %s172, 8 [#allocation4]
        %v228 = vld [vmem:[%s227] sm:$0xf]
        %v229 = vstv %s226
        %v230 = vmul.f32 %v229, %v228
        %v231 = vadd.f32 %v225, %v230
        %s232 = sld [smem:[#allocation3 + $0xc]]
        %s233 = scalar_lea.vmem %s172, 12 [#allocation4]
        %v234 = vld [vmem:[%s233] sm:$0xf]
        %v235 = vstv %s232
        %v236 = vmul.f32 %v235, %v234
        %v237 = vadd.f32 %v231, %v236
        %s238 = sld [smem:[#allocation3 + $0x14]]
        %v239 = vld [vmem:[%s181] sm:$0xf]
        %v240 = vstv %s238
        %v241 = vmul.f32 %v240, %v239
        %v242 = vadd.f32 %v237, %v241
        %s243 = sld [smem:[#allocation3 + $0x18]]
        %s244 = scalar_lea.vmem %s181, 4 [#allocation7]
        %v245 = vld [vmem:[%s244] sm:$0xf]
        %v246 = vstv %s243
        %v247 = vmul.f32 %v246, %v245
        %v248 = vadd.f32 %v242, %v247
        %s249 = sld [smem:[#allocation3 + $0x1c]]
        %s250 = scalar_lea.vmem %s181, 8 [#allocation7]
        %v251 = vld [vmem:[%s250] sm:$0xf]
        %v252 = vstv %s249
        %v253 = vmul.f32 %v252, %v251
        %v254 = vadd.f32 %v248, %v253
        %s255 = sld [smem:[#allocation3 + $0x20]]
        %s256 = scalar_lea.vmem %s181, 12 [#allocation7]
        %v257 = vld [vmem:[%s256] sm:$0xf]
        %v258 = vstv %s255
        %v259 = vmul.f32 %v258, %v257
        %v260 = vadd.f32 %v254, %v259
        %s261 = sld [smem:[#allocation3 + $0x24]]
        %s262 = scalar_lea.vmem %s181, 16 [#allocation7]
        %v263 = vld [vmem:[%s262] sm:$0xf]
        %v264 = vstv %s261
        %v265 = vmul.f32 %v264, %v263
        %v266 = vadd.f32 %v260, %v265
        %s267 = sld [smem:[#allocation3 + $0x28]]
        %s268 = scalar_lea.vmem %s181, 20 [#allocation7]
        %v269 = vld [vmem:[%s268] sm:$0xf]
        %v270 = vstv %s267
        %v271 = vmul.f32 %v270, %v269
        %v272 = vadd.f32 %v266, %v271
        %s273 = sld [smem:[#allocation3 + $0x2c]]
        %s274 = scalar_lea.vmem %s181, 24 [#allocation7]
        %v275 = vld [vmem:[%s274] sm:$0xf]
        %v276 = vstv %s273
        %v277 = vmul.f32 %v276, %v275
        %v278 = vadd.f32 %v272, %v277
        %s279 = sld [smem:[#allocation3 + $0x30]]
        %s280 = scalar_lea.vmem %s181, 28 [#allocation7]
        %v281 = vld [vmem:[%s280] sm:$0xf]
        %v282 = vstv %s279
        %v283 = vmul.f32 %v282, %v281
        %v284 = vadd.f32 %v278, %v283
        %v285 = vmax.f32 %v284, 0.0
        %s286 = sld [smem:[#allocation3 + $0x38]]
        %v287 = vstv %s286
        %v288 = vmul.f32 %v287, %v285
        %v289 = vadd.f32 %v209, %v288
        %s290 = sld [smem:[#allocation3 + $0x11]]
        %s291 = sld [smem:[#allocation3 + $0x35]]
        %s292 = sadd.f32 %s290, %s291
        %v293 = vstv %s292
        %v294 = vadd.f32 %v293, 0.0
        %s295 = sld [smem:[#allocation3 + $0x1]]
        %v296 = vstv %s295
        %v297 = vmul.f32 %v296, %v216
        %v298 = vadd.f32 %v294, %v297
        %s299 = sld [smem:[#allocation3 + $0x5]]
        %v300 = vstv %s299
        %v301 = vmul.f32 %v300, %v222
        %v302 = vadd.f32 %v298, %v301
        %s303 = sld [smem:[#allocation3 + $0x9]]
        %v304 = vstv %s303
        %v305 = vmul.f32 %v304, %v228
        %v306 = vadd.f32 %v302, %v305
        %s307 = sld [smem:[#allocation3 + $0xd]]
        %v308 = vstv %s307
        %v309 = vmul.f32 %v308, %v234
        %v310 = vadd.f32 %v306, %v309
        %s311 = sld [smem:[#allocation3 + $0x15]]
        %v312 = vstv %s311
        %v313 = vmul.f32 %v312, %v239
        %v314 = vadd.f32 %v310, %v313
        %s315 = sld [smem:[#allocation3 + $0x19]]
        %v316 = vstv %s315
        %v317 = vmul.f32 %v316, %v245
        %v318 = vadd.f32 %v314, %v317
        %s319 = sld [smem:[#allocation3 + $0x1d]]
        %v320 = vstv %s319
        %v321 = vmul.f32 %v320, %v251
        %v322 = vadd.f32 %v318, %v321
        %s323 = sld [smem:[#allocation3 + $0x21]]
        %v324 = vstv %s323
        %v325 = vmul.f32 %v324, %v257
        %v326 = vadd.f32 %v322, %v325
        %s327 = sld [smem:[#allocation3 + $0x25]]
        %v328 = vstv %s327
        %v329 = vmul.f32 %v328, %v263
        %v330 = vadd.f32 %v326, %v329
        %s331 = sld [smem:[#allocation3 + $0x29]]
        %v332 = vstv %s331
        %v333 = vmul.f32 %v332, %v269
        %v334 = vadd.f32 %v330, %v333
        %s335 = sld [smem:[#allocation3 + $0x2d]]
        %v336 = vstv %s335
        %v337 = vmul.f32 %v336, %v275
        %v338 = vadd.f32 %v334, %v337
        %s339 = sld [smem:[#allocation3 + $0x31]]
        %v340 = vstv %s339
        %v341 = vmul.f32 %v340, %v281
        %v342 = vadd.f32 %v338, %v341
        %v343 = vmax.f32 %v342, 0.0
        %s344 = sld [smem:[#allocation3 + $0x39]]
        %v345 = vstv %s344
        %v346 = vmul.f32 %v345, %v343
        %v347 = vadd.f32 %v289, %v346
        %s348 = sld [smem:[#allocation3 + $0x12]]
        %s349 = sld [smem:[#allocation3 + $0x36]]
        %s350 = sadd.f32 %s348, %s349
        %v351 = vstv %s350
        %v352 = vadd.f32 %v351, 0.0
        %s353 = sld [smem:[#allocation3 + $0x2]]
        %v354 = vstv %s353
        %v355 = vmul.f32 %v354, %v216
        %v356 = vadd.f32 %v352, %v355
        %s357 = sld [smem:[#allocation3 + $0x6]]
        %v358 = vstv %s357
        %v359 = vmul.f32 %v358, %v222
        %v360 = vadd.f32 %v356, %v359
        %s361 = sld [smem:[#allocation3 + $0xa]]
        %v362 = vstv %s361
        %v363 = vmul.f32 %v362, %v228
        %v364 = vadd.f32 %v360, %v363
        %s365 = sld [smem:[#allocation3 + $0xe]]
        %v366 = vstv %s365
        %v367 = vmul.f32 %v366, %v234
        %v368 = vadd.f32 %v364, %v367
        %s369 = sld [smem:[#allocation3 + $0x16]]
        %v370 = vstv %s369
        %v371 = vmul.f32 %v370, %v239
        %v372 = vadd.f32 %v368, %v371
        %s373 = sld [smem:[#allocation3 + $0x1a]]
        %v374 = vstv %s373
        %v375 = vmul.f32 %v374, %v245
        %v376 = vadd.f32 %v372, %v375
        %s377 = sld [smem:[#allocation3 + $0x1e]]
        %v378 = vstv %s377
        %v379 = vmul.f32 %v378, %v251
        %v380 = vadd.f32 %v376, %v379
        %s381 = sld [smem:[#allocation3 + $0x22]]
        %v382 = vstv %s381
        %v383 = vmul.f32 %v382, %v257
        %v384 = vadd.f32 %v380, %v383
        %s385 = sld [smem:[#allocation3 + $0x26]]
        %v386 = vstv %s385
        %v387 = vmul.f32 %v386, %v263
        %v388 = vadd.f32 %v384, %v387
        %s389 = sld [smem:[#allocation3 + $0x2a]]
        %v390 = vstv %s389
        %v391 = vmul.f32 %v390, %v269
        %v392 = vadd.f32 %v388, %v391
        %s393 = sld [smem:[#allocation3 + $0x2e]]
        %v394 = vstv %s393
        %v395 = vmul.f32 %v394, %v275
        %v396 = vadd.f32 %v392, %v395
        %s397 = sld [smem:[#allocation3 + $0x32]]
        %v398 = vstv %s397
        %v399 = vmul.f32 %v398, %v281
        %v400 = vadd.f32 %v396, %v399
        %v401 = vmax.f32 %v400, 0.0
        %s402 = sld [smem:[#allocation3 + $0x3a]]
        %v403 = vstv %s402
        %v404 = vmul.f32 %v403, %v401
        %v405 = vadd.f32 %v347, %v404
        %s406 = sld [smem:[#allocation3 + $0x13]]
        %s407 = sld [smem:[#allocation3 + $0x37]]
        %s408 = sadd.f32 %s406, %s407
        %v409 = vstv %s408
        %v410 = vadd.f32 %v409, 0.0
        %s411 = sld [smem:[#allocation3 + $0x3]]
        %v412 = vstv %s411
        %v413 = vmul.f32 %v412, %v216
        %v414 = vadd.f32 %v410, %v413
        %s415 = sld [smem:[#allocation3 + $0x7]]
        %v416 = vstv %s415
        %v417 = vmul.f32 %v416, %v222
        %v418 = vadd.f32 %v414, %v417
        %s419 = sld [smem:[#allocation3 + $0xb]]
        %v420 = vstv %s419
        %v421 = vmul.f32 %v420, %v228
        %v422 = vadd.f32 %v418, %v421
        %s423 = sld [smem:[#allocation3 + $0xf]]
        %v424 = vstv %s423
        %v425 = vmul.f32 %v424, %v234
        %v426 = vadd.f32 %v422, %v425
        %s427 = sld [smem:[#allocation3 + $0x17]]
        %v428 = vstv %s427
        %v429 = vmul.f32 %v428, %v239
        %v430 = vadd.f32 %v426, %v429
        %s431 = sld [smem:[#allocation3 + $0x1b]]
        %v432 = vstv %s431
        %v433 = vmul.f32 %v432, %v245
        %v434 = vadd.f32 %v430, %v433
        %s435 = sld [smem:[#allocation3 + $0x1f]]
        %v436 = vstv %s435
        %v437 = vmul.f32 %v436, %v251
        %v438 = vadd.f32 %v434, %v437
        %s439 = sld [smem:[#allocation3 + $0x23]]
        %v440 = vstv %s439
        %v441 = vmul.f32 %v440, %v257
        %v442 = vadd.f32 %v438, %v441
        %s443 = sld [smem:[#allocation3 + $0x27]]
        %v444 = vstv %s443
        %v445 = vmul.f32 %v444, %v263
        %v446 = vadd.f32 %v442, %v445
        %s447 = sld [smem:[#allocation3 + $0x2b]]
        %v448 = vstv %s447
        %v449 = vmul.f32 %v448, %v269
        %v450 = vadd.f32 %v446, %v449
        %s451 = sld [smem:[#allocation3 + $0x2f]]
        %v452 = vstv %s451
        %v453 = vmul.f32 %v452, %v275
        %v454 = vadd.f32 %v450, %v453
        %s455 = sld [smem:[#allocation3 + $0x33]]
        %v456 = vstv %s455
        %v457 = vmul.f32 %v456, %v281
        %v458 = vadd.f32 %v454, %v457
        %v459 = vmax.f32 %v458, 0.0
        %s460 = sld [smem:[#allocation3 + $0x3b]]
        %v461 = vstv %s460
        %v462 = vmul.f32 %v461, %v459
        %v463 = vadd.f32 %v405, %v462
        %v464 = vsub.f32 0.0, %v463
        %v465 = vmul.f32 %v464, 1.442695
        %v466 = vpow.pop %v465
        %v467 = vadd.f32 %v466, 1.0
        %v468 = vrcp.pop %v467
        %v469 = vmul.f32 1.0, %v468
        %vm470 = vcmask 519168
        %471 = vst.msk [vmem:[%s206] sm:$0xf] %vm470, %v469
        %s472 = sand.u32 %s87, 1
        %s473 = scalar_lea.sflag [#allocation6], %s472
        %s474 = sand.u32 %s87, 1
        %s475 = smul.addr %s474, 4
        %s476 = scalar_lea.vmem [#allocation9], %s475
        // Predicated region
        $region37: #{tpu_custom_call.1} parent=27 // pred_check
          %p477 = pneg %p97
        $region38: #{tpu_custom_call.1} parent=27 // pred_check_branch
          %479 = sbr.rel (%p477) target = $region40
        $region39: #{tpu_custom_call.1} parent=27 // pred_region
          %s481 = ssub.s32 64, 64
          %482 = vsyncadd %s473, %s481
          %s483 = smul.addr %s27, 64
          %s484 = scalar_lea.hbm %s3, %s483
          %s486 = sshll.u32 %s476, 4
          %s487 = int_to_ptr.vmem [resolvable:$true] %s486
          %489 = dma.vmem_to_hbm [thread:$0]  %s487, 64, %s484, %s473
        $region40: #{tpu_custom_call.1} parent=27 // pred_fallthru
          _
      $region28: #{tpu_custom_call.1} parent=5 // pred_fallthru
        _
      %p490 = scmp.le.s32.totalorder 2, %s22
      // Predicated region
      $region41: #{tpu_custom_call.1} parent=5 // pred_check
        %p491 = pneg %p490
      $region42: #{tpu_custom_call.1} parent=5 // pred_check_branch
        %493 = sbr.rel (%p491) target = $region44
      $region43: #{tpu_custom_call.1} parent=5 // pred_region
        %s494 = ssub.s32 %s22, 2
        // Predicated region
        $region45: #{tpu_custom_call.1} parent=43 // pred_check
          %p495 = pneg %p103
        $region46: #{tpu_custom_call.1} parent=43 // pred_check_branch
          %497 = sbr.rel (%p495) target = $region48
        $region47: #{tpu_custom_call.1} parent=43 // pred_region
          %s498 = sand.u32 %s88, 1
          %s499 = scalar_lea.sflag [#allocation6], %s498
          %s500 = sand.u32 %s88, 1
          %s501 = smul.addr %s500, 4
          %s502 = scalar_lea.vmem [#allocation9], %s501
          %503 = dma.done %s499, 64
        $region48: #{tpu_custom_call.1} parent=43 // pred_fallthru
          _
      $region44: #{tpu_custom_call.1} parent=5 // pred_fallthru
        _
    $region6: #{tpu_custom_call.1} parent=1 // loop_footer
      %s26 = sadd.s32 1, %s22
    $region7: #{tpu_custom_call.1} parent=1 // loop_footer_branch
      %21 = sbr.rel target = $region3
    $region8: #{tpu_custom_call.1} parent=1 // loop_exit
      _
    %504 = vsyncpa [#allocation5], 1
    %s505 = scalar_lea.sflag [#allocation5], 1
    %506 = vsyncpa %s505, 1
    %507 = vsyncpa [#allocation8], 1
    %s508 = scalar_lea.sflag [#allocation8], 1
    %509 = vsyncpa %s508, 1
    %510 = vsyncpa [#allocation6], 1
    %s511 = scalar_lea.sflag [#allocation6], 1
    %512 = vsyncpa %s511, 1

</llo_original>
